<compile_context>
chip_gen: v5e
topology: v5e:2x2
jax: 0.10.0
libtpu: 0.0.40
codegen_flags: <defaults>
</compile_context>

<pallas_src>
import functools

import jax
import jax.numpy as jnp
from jax.experimental import pallas as pl
from jax.experimental.pallas import tpu as pltpu


def _lid_prompt_kernel(ids_ref, xs_ref, emb_ref, gamma_ref, beta_ref,
                       expand_ref, seg_ref, out_ref,
                       *, lid_class: int, inv_d: float, eps: float):
    """One grid step processes a (tm, L) tile of packed rows (L = P * D).

    ids_ref    : (tm, P)         int32  language id of each packed sub-row
    xs_ref     : (tm, L)         f32    encoder outputs, P rows of width D each
    emb_ref    : (lid_class, L)  f32    embedding table, each row tiled P times
    gamma_ref  : (1, L)          f32    LayerNorm weight, tiled P times
    beta_ref   : (1, L)          f32    LayerNorm bias, tiled P times
    expand_ref : (P, L)          f32    expand[g, j] = 1 if j // D == g
    seg_ref    : (L, L)          f32    seg[i, j]    = 1 if i // D == j // D
    out_ref    : (tm, L)
    """
    # Broadcast each sub-row's id to its D lanes: (tm, P) @ (P, L) -> (tm, L).
    ids_lane = jnp.dot(ids_ref[...].astype(jnp.float32), expand_ref[...],
                       preferred_element_type=jnp.float32)

    # Embedding lookup via VPU compare/select accumulation over classes.
    # TODO(synk): ids outside [0, lid_class) silently add a zero embedding
    # instead of erroring like torch.nn.Embedding.
    x = xs_ref[...].astype(jnp.float32)
    for c in range(lid_class):
        x = x + jnp.where(ids_lane == float(c), emb_ref[c:c + 1, :], 0.0)

    # LayerNorm over each D-wide lane group (centered two-pass, MXU seg-sums).
    seg = seg_ref[...]
    mean = jnp.dot(x, seg, preferred_element_type=jnp.float32) * inv_d
    centered = x - mean
    var = jnp.dot(centered * centered, seg,
                  preferred_element_type=jnp.float32) * inv_d
    inv = jax.lax.rsqrt(var + eps)
    y = centered * inv * gamma_ref[...] + beta_ref[...]
    out_ref[...] = y.astype(out_ref.dtype)


def lid_prompt_encoder(xs, tab_clone, emb_table, gamma, beta,
                       *, eps: float = 1e-5, tm_cap: int = 2048):
    """JAX wrapper.

    xs        : (B, T, D) float32 (or bfloat16)
    tab_clone : (B, T)    integer language ids in [0, lid_class)
    emb_table : (lid_class, D) float32
    gamma     : (D,) float32
    beta      : (D,) float32
    returns   : (B, T, D) with xs.dtype
    """
    B, T, D = xs.shape
    lid_class = emb_table.shape[0]
    rows = B * T

    # Lane packing: P consecutive rows share one 128-wide packed row when
    # D < 128, so stores are lane-dense.
    pack = 128 // D if (D < 128 and 128 % D == 0) else 1
    lane = pack * D

    # Pad the row count so packed rows are a multiple of `pack` (always) and
    # of 8 sublanes (when more than one sublane tile is needed).
    pad_mult = pack if rows <= 8 * pack else 8 * pack
    padded_rows = -(-rows // pad_mult) * pad_mult

    xs_flat = xs.reshape(rows, D)
    ids_flat = tab_clone.reshape(rows).astype(jnp.int32)
    if padded_rows != rows:
        extra = padded_rows - rows
        xs_flat = jnp.pad(xs_flat, ((0, extra), (0, 0)))
        ids_flat = jnp.pad(ids_flat, ((0, extra),))

    packed_rows = padded_rows // pack
    xs_packed = xs_flat.reshape(packed_rows, lane)
    ids_packed = ids_flat.reshape(packed_rows, pack)

    # Row tile: ~1 MiB of xs per tile (amortizes per-step pipeline overhead)
    # while staying far inside the scoped VMEM limit on all generations
    # (including v7x's 64 MiB per TensorCore) with double-buffered in + out.
    bytes_per_row = lane * 4
    cap = min(tm_cap, max(8, ((1 << 20) // bytes_per_row) // 8 * 8))
    if packed_rows <= cap:
        tm = packed_rows
    else:
        tm = cap
        while packed_rows % tm != 0:   # packed_rows is a multiple of 8 here
            tm -= 8
    grid = packed_rows // tm

    # Constant side inputs; block index is always (0, 0) so they are DMA'd
    # once and held resident in VMEM.
    emb_packed = jnp.tile(emb_table.astype(jnp.float32), (1, pack))
    gamma_packed = jnp.tile(gamma.astype(jnp.float32).reshape(1, D), (1, pack))
    beta_packed = jnp.tile(beta.astype(jnp.float32).reshape(1, D), (1, pack))
    group = jnp.arange(lane, dtype=jnp.int32) // D
    expand = (group[None, :] == jnp.arange(pack, dtype=jnp.int32)[:, None]
              ).astype(jnp.float32)                                 # (P, L)
    seg = (group[:, None] == group[None, :]).astype(jnp.float32)    # (L, L)

    kernel = functools.partial(_lid_prompt_kernel, lid_class=lid_class,
                               inv_d=1.0 / D, eps=eps)

    out_packed = pl.pallas_call(
        kernel,
        out_shape=jax.ShapeDtypeStruct((packed_rows, lane), xs.dtype),
        grid_spec=pltpu.PrefetchScalarGridSpec(
            num_scalar_prefetch=0,
            grid=(grid,),
            in_specs=[
                pl.BlockSpec((tm, pack), lambda i: (i, 0)),          # ids
                pl.BlockSpec((tm, lane), lambda i: (i, 0)),          # xs
                pl.BlockSpec((lid_class, lane), lambda i: (0, 0)),   # emb table
                pl.BlockSpec((1, lane), lambda i: (0, 0)),           # gamma
                pl.BlockSpec((1, lane), lambda i: (0, 0)),           # beta
                pl.BlockSpec((pack, lane), lambda i: (0, 0)),        # expand
                pl.BlockSpec((lane, lane), lambda i: (0, 0)),        # seg-sum
            ],
            out_specs=pl.BlockSpec((tm, lane), lambda i: (i, 0)),
        ),
        compiler_params=pltpu.CompilerParams(
            dimension_semantics=("parallel",),
            vmem_limit_bytes=32 * 1024 * 1024,
        ),
    )(ids_packed, xs_packed, emb_packed, gamma_packed, beta_packed,
      expand, seg)

    out_flat = out_packed.reshape(padded_rows, D)[:rows]
    return out_flat.reshape(B, T, D)


def _reference(xs, tab_clone, emb_table, gamma, beta, eps=1e-5):
    """Pure-JAX reference matching the PyTorch forward."""
    lid_emb = emb_table[tab_clone]          # (B, T, D)
    x = xs + lid_emb
    mean = jnp.mean(x, axis=-1, keepdims=True)
    var = jnp.mean((x - mean) ** 2, axis=-1, keepdims=True)
    return (x - mean) / jnp.sqrt(var + eps) * gamma + beta


if __name__ == "__main__":
    # Small shapes consistent with the module's forward.
    B, T, D = 2, 8, 32          # batch, seq, encoder_output_size
    LID_CLASS = 4               # number of language-id classes

    key = jax.random.PRNGKey(0)
    k_xs, k_emb, k_g, k_b, k_ids, k_xs2, k_ids2 = jax.random.split(key, 7)

    xs = jax.random.normal(k_xs, (B, T, D), dtype=jnp.float32)
    tab_clone = jax.random.randint(k_ids, (B, T), 0, LID_CLASS, dtype=jnp.int32)

    # Deterministic synthetic parameters (shapes from __init__).
    emb_table = jax.random.normal(k_emb, (LID_CLASS, D), dtype=jnp.float32)
    gamma = 1.0 + 0.1 * jax.random.normal(k_g, (D,), dtype=jnp.float32)
    beta = 0.1 * jax.random.normal(k_b, (D,), dtype=jnp.float32)

    out = lid_prompt_encoder(xs, tab_clone, emb_table, gamma, beta)
    out = jax.block_until_ready(out)
    ref = _reference(xs, tab_clone, emb_table, gamma, beta)
    assert out.shape == (B, T, D)
    assert jnp.allclose(out, ref, atol=1e-4, rtol=1e-4), "mismatch vs reference"

    # Second config: exercises row padding and a multi-step (pipelined) grid.
    B2, T2 = 3, 50
    xs2 = jax.random.normal(k_xs2, (B2, T2, D), dtype=jnp.float32)
    tab2 = jax.random.randint(k_ids2, (B2, T2), 0, LID_CLASS, dtype=jnp.int32)
    out2 = lid_prompt_encoder(xs2, tab2, emb_table, gamma, beta, tm_cap=8)
    out2 = jax.block_until_ready(out2)
    ref2 = _reference(xs2, tab2, emb_table, gamma, beta)
    assert out2.shape == (B2, T2, D)
    assert jnp.allclose(out2, ref2, atol=1e-4, rtol=1e-4), "mismatch (tiled)"

    print("KERNEL_OK")
</pallas_src>

<mosaic_0001>
module attributes {stable_mosaic.version = 11 : i64} {
  func.func @_lid_prompt_kernel(%arg0: i32, %arg1: memref<4x4xi32, #tpu.memory_space<vmem>>, %arg2: memref<4x128xf32, #tpu.memory_space<vmem>>, %arg3: memref<4x128xf32, #tpu.memory_space<vmem>>, %arg4: memref<1x128xf32, #tpu.memory_space<vmem>>, %arg5: memref<1x128xf32, #tpu.memory_space<vmem>>, %arg6: memref<4x128xf32, #tpu.memory_space<vmem>>, %arg7: memref<128x128xf32, #tpu.memory_space<vmem>>, %arg8: memref<4x128xf32, #tpu.memory_space<vmem>>) attributes {dimension_semantics = [#tpu.dimension_semantics<parallel>], iteration_bounds = array<i64: 1>, scalar_prefetch = 0 : i64, scratch_operands = 0 : i64, tpu.core_type = #tpu.core_type<tc>, window_params = [{transform_indices = @transform_0, window_bounds = array<i64: 4, 4>}, {transform_indices = @transform_1, window_bounds = array<i64: 4, 128>}, {pipeline_mode = #tpu.pipeline_mode<synchronous>, transform_indices = @transform_2, window_bounds = array<i64: 4, 128>}, {pipeline_mode = #tpu.pipeline_mode<synchronous>, transform_indices = @transform_3, window_bounds = array<i64: 1, 128>}, {pipeline_mode = #tpu.pipeline_mode<synchronous>, transform_indices = @transform_4, window_bounds = array<i64: 1, 128>}, {pipeline_mode = #tpu.pipeline_mode<synchronous>, transform_indices = @transform_5, window_bounds = array<i64: 4, 128>}, {pipeline_mode = #tpu.pipeline_mode<synchronous>, transform_indices = @transform_6, window_bounds = array<i64: 128, 128>}, {transform_indices = @transform_7, window_bounds = array<i64: 4, 128>}]} {
    %c0 = arith.constant 0 : index
    %c0_0 = arith.constant 0 : index
    %0 = vector.load %arg1[%c0, %c0_0] : memref<4x4xi32, #tpu.memory_space<vmem>>, vector<4x4xi32>
    %1 = arith.sitofp %0 : vector<4x4xi32> to vector<4x4xf32>
    %c0_1 = arith.constant 0 : index
    %c0_2 = arith.constant 0 : index
    %2 = vector.load %arg6[%c0_1, %c0_2] : memref<4x128xf32, #tpu.memory_space<vmem>>, vector<4x128xf32>
    %cst = arith.constant dense<0.000000e+00> : vector<4x128xf32>
    %3 = tpu.matmul %1, %2, %cst {dimension_numbers = #tpu.dot_dimension_numbers<[1], [0], [0], [1], [0, 0, 1, 1], [], []>} : vector<4x4xf32>, vector<4x128xf32>, vector<4x128xf32> -> vector<4x128xf32>
    %c0_3 = arith.constant 0 : index
    %c0_4 = arith.constant 0 : index
    %4 = vector.load %arg2[%c0_3, %c0_4] : memref<4x128xf32, #tpu.memory_space<vmem>>, vector<4x128xf32>
    %cst_5 = arith.constant 0.000000e+00 : f32
    %5 = vector.broadcast %cst_5 : f32 to vector<4x128xf32>
    %6 = arith.cmpf oeq, %3, %5 : vector<4x128xf32>
    %c0_6 = arith.constant 0 : index
    %c0_7 = arith.constant 0 : index
    %7 = vector.load %arg3[%c0_6, %c0_7] : memref<4x128xf32, #tpu.memory_space<vmem>>, vector<1x128xf32>
    %cst_8 = arith.constant 0.000000e+00 : f32
    %8 = vector.shape_cast %7 : vector<1x128xf32> to vector<1x128xf32>
    %9 = vector.broadcast %8 : vector<1x128xf32> to vector<4x128xf32>
    %10 = vector.broadcast %cst_8 : f32 to vector<4x128xf32>
    %11 = arith.select %6, %9, %10 : vector<4x128xi1>, vector<4x128xf32>
    %12 = arith.addf %4, %11 : vector<4x128xf32>
    %cst_9 = arith.constant 1.000000e+00 : f32
    %13 = vector.broadcast %cst_9 : f32 to vector<4x128xf32>
    %14 = arith.cmpf oeq, %3, %13 : vector<4x128xf32>
    %c1 = arith.constant 1 : index
    %c0_10 = arith.constant 0 : index
    %15 = vector.load %arg3[%c1, %c0_10] : memref<4x128xf32, #tpu.memory_space<vmem>>, vector<1x128xf32>
    %cst_11 = arith.constant 0.000000e+00 : f32
    %16 = vector.shape_cast %15 : vector<1x128xf32> to vector<1x128xf32>
    %17 = vector.broadcast %16 : vector<1x128xf32> to vector<4x128xf32>
    %18 = vector.broadcast %cst_11 : f32 to vector<4x128xf32>
    %19 = arith.select %14, %17, %18 : vector<4x128xi1>, vector<4x128xf32>
    %20 = arith.addf %12, %19 : vector<4x128xf32>
    %cst_12 = arith.constant 2.000000e+00 : f32
    %21 = vector.broadcast %cst_12 : f32 to vector<4x128xf32>
    %22 = arith.cmpf oeq, %3, %21 : vector<4x128xf32>
    %c2 = arith.constant 2 : index
    %c0_13 = arith.constant 0 : index
    %23 = vector.load %arg3[%c2, %c0_13] : memref<4x128xf32, #tpu.memory_space<vmem>>, vector<1x128xf32>
    %cst_14 = arith.constant 0.000000e+00 : f32
    %24 = vector.shape_cast %23 : vector<1x128xf32> to vector<1x128xf32>
    %25 = vector.broadcast %24 : vector<1x128xf32> to vector<4x128xf32>
    %26 = vector.broadcast %cst_14 : f32 to vector<4x128xf32>
    %27 = arith.select %22, %25, %26 : vector<4x128xi1>, vector<4x128xf32>
    %28 = arith.addf %20, %27 : vector<4x128xf32>
    %cst_15 = arith.constant 3.000000e+00 : f32
    %29 = vector.broadcast %cst_15 : f32 to vector<4x128xf32>
    %30 = arith.cmpf oeq, %3, %29 : vector<4x128xf32>
    %c3 = arith.constant 3 : index
    %c0_16 = arith.constant 0 : index
    %31 = vector.load %arg3[%c3, %c0_16] : memref<4x128xf32, #tpu.memory_space<vmem>>, vector<1x128xf32>
    %cst_17 = arith.constant 0.000000e+00 : f32
    %32 = vector.shape_cast %31 : vector<1x128xf32> to vector<1x128xf32>
    %33 = vector.broadcast %32 : vector<1x128xf32> to vector<4x128xf32>
    %34 = vector.broadcast %cst_17 : f32 to vector<4x128xf32>
    %35 = arith.select %30, %33, %34 : vector<4x128xi1>, vector<4x128xf32>
    %36 = arith.addf %28, %35 : vector<4x128xf32>
    %c0_18 = arith.constant 0 : index
    %c0_19 = arith.constant 0 : index
    %37 = vector.load %arg7[%c0_18, %c0_19] : memref<128x128xf32, #tpu.memory_space<vmem>>, vector<128x128xf32>
    %cst_20 = arith.constant dense<0.000000e+00> : vector<4x128xf32>
    %38 = tpu.matmul %36, %37, %cst_20 {dimension_numbers = #tpu.dot_dimension_numbers<[1], [0], [0], [1], [0, 0, 1, 1], [], []>} : vector<4x128xf32>, vector<128x128xf32>, vector<4x128xf32> -> vector<4x128xf32>
    %cst_21 = arith.constant 3.125000e-02 : f32
    %39 = vector.broadcast %cst_21 : f32 to vector<4x128xf32>
    %40 = arith.mulf %38, %39 : vector<4x128xf32>
    %41 = arith.subf %36, %40 : vector<4x128xf32>
    %42 = arith.mulf %41, %41 : vector<4x128xf32>
    %cst_22 = arith.constant dense<0.000000e+00> : vector<4x128xf32>
    %43 = tpu.matmul %42, %37, %cst_22 {dimension_numbers = #tpu.dot_dimension_numbers<[1], [0], [0], [1], [0, 0, 1, 1], [], []>} : vector<4x128xf32>, vector<128x128xf32>, vector<4x128xf32> -> vector<4x128xf32>
    %cst_23 = arith.constant 3.125000e-02 : f32
    %44 = vector.broadcast %cst_23 : f32 to vector<4x128xf32>
    %45 = arith.mulf %43, %44 : vector<4x128xf32>
    %cst_24 = arith.constant 9.99999974E-6 : f32
    %46 = vector.broadcast %cst_24 : f32 to vector<4x128xf32>
    %47 = arith.addf %45, %46 : vector<4x128xf32>
    %48 = math.rsqrt %47 : vector<4x128xf32>
    %49 = arith.mulf %41, %48 : vector<4x128xf32>
    %c0_25 = arith.constant 0 : index
    %c0_26 = arith.constant 0 : index
    %50 = vector.load %arg4[%c0_25, %c0_26] : memref<1x128xf32, #tpu.memory_space<vmem>>, vector<1x128xf32>
    %51 = vector.broadcast %50 : vector<1x128xf32> to vector<4x128xf32>
    %52 = arith.mulf %49, %51 : vector<4x128xf32>
    %c0_27 = arith.constant 0 : index
    %c0_28 = arith.constant 0 : index
    %53 = vector.load %arg5[%c0_27, %c0_28] : memref<1x128xf32, #tpu.memory_space<vmem>>, vector<1x128xf32>
    %54 = vector.broadcast %53 : vector<1x128xf32> to vector<4x128xf32>
    %55 = arith.addf %52, %54 : vector<4x128xf32>
    %c0_29 = arith.constant 0 : index
    %c0_30 = arith.constant 0 : index
    %56 = vector.load %arg8[%c0_29, %c0_30] : memref<4x128xf32, #tpu.memory_space<vmem>>, vector<4x128xf32>
    tpu.vector_store %arg8[%c0_29, %c0_30], %55 {strides = array<i32>} : memref<4x128xf32, #tpu.memory_space<vmem>>, vector<4x128xf32>,
    return
  }
  func.func @transform_0(%arg0: i32) -> (i32, i32) {
    %c0_i32 = arith.constant 0 : i32
    %c0_i32_0 = arith.constant 0 : i32
    return %arg0, %c0_i32 : i32, i32
  }
  func.func @transform_1(%arg0: i32) -> (i32, i32) {
    %c0_i32 = arith.constant 0 : i32
    %c0_i32_0 = arith.constant 0 : i32
    return %arg0, %c0_i32 : i32, i32
  }
  func.func @transform_2(%arg0: i32) -> (i32, i32) {
    %c0_i32 = arith.constant 0 : i32
    %c0_i32_0 = arith.constant 0 : i32
    %c0_i32_1 = arith.constant 0 : i32
    return %c0_i32, %c0_i32_0 : i32, i32
  }
  func.func @transform_3(%arg0: i32) -> (i32, i32) {
    %c0_i32 = arith.constant 0 : i32
    %c0_i32_0 = arith.constant 0 : i32
    %c0_i32_1 = arith.constant 0 : i32
    return %c0_i32, %c0_i32_0 : i32, i32
  }
  func.func @transform_4(%arg0: i32) -> (i32, i32) {
    %c0_i32 = arith.constant 0 : i32
    %c0_i32_0 = arith.constant 0 : i32
    %c0_i32_1 = arith.constant 0 : i32
    return %c0_i32, %c0_i32_0 : i32, i32
  }
  func.func @transform_5(%arg0: i32) -> (i32, i32) {
    %c0_i32 = arith.constant 0 : i32
    %c0_i32_0 = arith.constant 0 : i32
    %c0_i32_1 = arith.constant 0 : i32
    return %c0_i32, %c0_i32_0 : i32, i32
  }
  func.func @transform_6(%arg0: i32) -> (i32, i32) {
    %c0_i32 = arith.constant 0 : i32
    %c0_i32_0 = arith.constant 0 : i32
    %c0_i32_1 = arith.constant 0 : i32
    return %c0_i32, %c0_i32_0 : i32, i32
  }
  func.func @transform_7(%arg0: i32) -> (i32, i32) {
    %c0_i32 = arith.constant 0 : i32
    %c0_i32_0 = arith.constant 0 : i32
    return %arg0, %c0_i32 : i32, i32
  }
}

</mosaic_0001>

<llo_original>
// kernel: tpu_custom_call.1
$region0: #{tpu_custom_call.1}
  #allocation0 [shape = 'u32[]', space=smem, size = 0x4, offset = 0x4, fixed_abs, tag = 'smem constant byte address 0x4 - core index']
  #allocation1 [shape = 'u32[72,128]{1,0:T(1,128)}', space=vmem, size = 0x9000, scoped, tag = 'internal scratch']
  %s0 = inlined_call_operand.hbm [shape: s32[4,4], index: 0, kind: input, shape index: {}]
  %s1 = inlined_call_operand.hbm [shape: f32[4,128], index: 1, kind: input, shape index: {}]
  %s2 = inlined_call_operand.hbm [shape: f32[4,128], index: 2, kind: input, shape index: {}]
  %s3 = inlined_call_operand.hbm [shape: f32[1,128], index: 3, kind: input, shape index: {}]
  %s4 = inlined_call_operand.hbm [shape: f32[1,128], index: 4, kind: input, shape index: {}]
  %s5 = inlined_call_operand.vmem [shape: f32[4,128], index: 5, kind: input, shape index: {}]
  %s6 = inlined_call_operand.hbm [shape: f32[128,128], index: 6, kind: input, shape index: {}]
  %s7 = inlined_call_operand.hbm [shape: f32[4,128], index: 7, kind: output, shape index: {}]
  %s8 = sld [smem:[#allocation0]]
  $region62: #{tpu_custom_call.1} parent=0
    _
  %s10 = ssub.s32 1, %s8
  %s11 = scalar_select 0, %s10, %s8
  $region1: #{tpu_custom_call.1} parent=0
    #allocation2 [shape = 'u8[2048]{0}', space=vmem, size = 0x800, scoped, tag = 'input window, operand 0, single buffered']
    #allocation3 [shape = 's32[1]{0}', space=sflag, size = 0x4, scoped, tag = 'scoped memory for tpu_custom_call.1']
    #allocation4 [shape = 's32[1]{0}', space=sflag, size = 0x4, scoped, tag = 'scoped memory for tpu_custom_call.1']
    #allocation5 [shape = 'u8[2048]{0}', space=vmem, size = 0x800, scoped, tag = 'input window, operand 1, single buffered']
    #allocation6 [shape = 's32[1]{0}', space=sflag, size = 0x4, scoped, tag = 'scoped memory for tpu_custom_call.1']
    #allocation7 [shape = 'u8[2048]{0}', space=vmem, size = 0x800, scoped, tag = 'input window, operand 2, single buffered']
    #allocation8 [shape = 'u8[512]{0}', space=vmem, size = 0x400, scoped, tag = 'input window, operand 3, single buffered']
    #allocation9 [shape = 's32[1]{0}', space=sflag, size = 0x4, scoped, tag = 'scoped memory for tpu_custom_call.1']
    #allocation10 [shape = 'u8[512]{0}', space=vmem, size = 0x400, scoped, tag = 'input window, operand 4, single buffered']
    #allocation11 [shape = 'u8[65536]{0}', space=vmem, size = 0x10000, scoped, tag = 'input window, operand 6, single buffered']
    #allocation12 [shape = 's32[1]{0}', space=sflag, size = 0x4, scoped, tag = 'scoped memory for tpu_custom_call.1']
    #allocation13 [shape = 'u8[2048]{0}', space=vmem, size = 0x800, scoped, tag = 'output window, operand 0, single buffered']
    %12 = vsyncpa [#allocation3], 0
    %13 = vsyncpa [#allocation6], 0
    %14 = vsyncpa [#allocation9], 0
    %15 = vsyncpa [#allocation12], 0
    %16 = vsyncpa [#allocation4], 0
    // Predicated region
    $region2: #{tpu_custom_call.1} parent=1 // pred_check
      _
    $region3: #{tpu_custom_call.1} parent=1 // pred_check_branch
      %18 = sbr.rel (0) target = $region5
    $region4: #{tpu_custom_call.1} parent=1 // pred_region
      %20 = vsyncadd [#allocation3], 0
      %s22 = sshll.u32 %s0, 4
      %s23 = int_to_ptr.hbm [resolvable:$true] %s22
      %s24 = sshll.u32 [#allocation2], 4
      %s25 = int_to_ptr.vmem [resolvable:$true] %s24
      %27 = dma.hbm_to_vmem [thread:$0]  %s23, 64, %s25, [#allocation3]
    $region5: #{tpu_custom_call.1} parent=1 // pred_fallthru
      _
    // Predicated region
    $region6: #{tpu_custom_call.1} parent=1 // pred_check
      _
    $region7: #{tpu_custom_call.1} parent=1 // pred_check_branch
      %29 = sbr.rel (0) target = $region9
    $region8: #{tpu_custom_call.1} parent=1 // pred_region
      %31 = vsyncadd [#allocation6], 0
      %s33 = sshll.u32 %s1, 4
      %s34 = int_to_ptr.hbm [resolvable:$true] %s33
      %s35 = sshll.u32 [#allocation5], 4
      %s36 = int_to_ptr.vmem [resolvable:$true] %s35
      %38 = dma.hbm_to_vmem [thread:$0]  %s34, 64, %s36, [#allocation6]
    $region9: #{tpu_custom_call.1} parent=1 // pred_fallthru
      _
    // Predicated region
    $region10: #{tpu_custom_call.1} parent=1 // pred_check
      _
    $region11: #{tpu_custom_call.1} parent=1 // pred_check_branch
      %40 = sbr.rel (0) target = $region13
    $region12: #{tpu_custom_call.1} parent=1 // pred_region
      %42 = vsyncadd [#allocation6], 0
      %s44 = sshll.u32 %s2, 4
      %s45 = int_to_ptr.hbm [resolvable:$true] %s44
      %s46 = sshll.u32 [#allocation7], 4
      %s47 = int_to_ptr.vmem [resolvable:$true] %s46
      %49 = dma.hbm_to_vmem [thread:$0]  %s45, 64, %s47, [#allocation6]
    $region13: #{tpu_custom_call.1} parent=1 // pred_fallthru
      _
    // Predicated region
    $region14: #{tpu_custom_call.1} parent=1 // pred_check
      _
    $region15: #{tpu_custom_call.1} parent=1 // pred_check_branch
      %51 = sbr.rel (0) target = $region17
    $region16: #{tpu_custom_call.1} parent=1 // pred_region
      %53 = vsyncadd [#allocation9], 0
      %s55 = sshll.u32 %s3, 4
      %s56 = int_to_ptr.hbm [resolvable:$true] %s55
      %s57 = sshll.u32 [#allocation8], 4
      %s58 = int_to_ptr.vmem [resolvable:$true] %s57
      %60 = dma.hbm_to_vmem [thread:$0]  %s56, 16, %s58, [#allocation9]
    $region17: #{tpu_custom_call.1} parent=1 // pred_fallthru
      _
    // Predicated region
    $region18: #{tpu_custom_call.1} parent=1 // pred_check
      _
    $region19: #{tpu_custom_call.1} parent=1 // pred_check_branch
      %62 = sbr.rel (0) target = $region21
    $region20: #{tpu_custom_call.1} parent=1 // pred_region
      %64 = vsyncadd [#allocation9], 0
      %s66 = sshll.u32 %s4, 4
      %s67 = int_to_ptr.hbm [resolvable:$true] %s66
      %s68 = sshll.u32 [#allocation10], 4
      %s69 = int_to_ptr.vmem [resolvable:$true] %s68
      %71 = dma.hbm_to_vmem [thread:$0]  %s67, 16, %s69, [#allocation9]
    $region21: #{tpu_custom_call.1} parent=1 // pred_fallthru
      _
    // Predicated region
    $region22: #{tpu_custom_call.1} parent=1 // pred_check
      _
    $region23: #{tpu_custom_call.1} parent=1 // pred_check_branch
      %73 = sbr.rel (0) target = $region25
    $region24: #{tpu_custom_call.1} parent=1 // pred_region
      _
    $region25: #{tpu_custom_call.1} parent=1 // pred_fallthru
      _
    // Predicated region
    $region26: #{tpu_custom_call.1} parent=1 // pred_check
      _
    $region27: #{tpu_custom_call.1} parent=1 // pred_check_branch
      %75 = sbr.rel (0) target = $region29
    $region28: #{tpu_custom_call.1} parent=1 // pred_region
      %77 = vsyncadd [#allocation12], 0
      %s78 = sshll.u32 %s6, 4
      %s79 = int_to_ptr.hbm [resolvable:$true] %s78
      %s80 = sshll.u32 [#allocation11], 4
      %s81 = int_to_ptr.vmem [resolvable:$true] %s80
      %86 = dma.hbm_to_vmem [thread:$0]  %s79, 2048, %s81, [#allocation12], 128, 128, 8
    $region29: #{tpu_custom_call.1} parent=1 // pred_fallthru
      _
    // Predicated region
    $region30: #{tpu_custom_call.1} parent=1 // pred_check
      _
    $region31: #{tpu_custom_call.1} parent=1 // pred_check_branch
      %88 = sbr.rel (0) target = $region33
    $region32: #{tpu_custom_call.1} parent=1 // pred_region
      %90 = dma.done [#allocation3], 64
    $region33: #{tpu_custom_call.1} parent=1 // pred_fallthru
      _
    // Predicated region
    $region34: #{tpu_custom_call.1} parent=1 // pred_check
      _
    $region35: #{tpu_custom_call.1} parent=1 // pred_check_branch
      %92 = sbr.rel (0) target = $region37
    $region36: #{tpu_custom_call.1} parent=1 // pred_region
      %94 = dma.done [#allocation6], 64
    $region37: #{tpu_custom_call.1} parent=1 // pred_fallthru
      _
    // Predicated region
    $region38: #{tpu_custom_call.1} parent=1 // pred_check
      _
    $region39: #{tpu_custom_call.1} parent=1 // pred_check_branch
      %96 = sbr.rel (0) target = $region41
    $region40: #{tpu_custom_call.1} parent=1 // pred_region
      %98 = dma.done [#allocation6], 64
    $region41: #{tpu_custom_call.1} parent=1 // pred_fallthru
      _
    // Predicated region
    $region42: #{tpu_custom_call.1} parent=1 // pred_check
      _
    $region43: #{tpu_custom_call.1} parent=1 // pred_check_branch
      %100 = sbr.rel (0) target = $region45
    $region44: #{tpu_custom_call.1} parent=1 // pred_region
      %102 = dma.done [#allocation9], 16
    $region45: #{tpu_custom_call.1} parent=1 // pred_fallthru
      _
    // Predicated region
    $region46: #{tpu_custom_call.1} parent=1 // pred_check
      _
    $region47: #{tpu_custom_call.1} parent=1 // pred_check_branch
      %104 = sbr.rel (0) target = $region49
    $region48: #{tpu_custom_call.1} parent=1 // pred_region
      %106 = dma.done [#allocation9], 16
    $region49: #{tpu_custom_call.1} parent=1 // pred_fallthru
      _
    // Predicated region
    $region50: #{tpu_custom_call.1} parent=1 // pred_check
      _
    $region51: #{tpu_custom_call.1} parent=1 // pred_check_branch
      %108 = sbr.rel (0) target = $region53
    $region52: #{tpu_custom_call.1} parent=1 // pred_region
      %110 = dma.done [#allocation12], 2048
    $region53: #{tpu_custom_call.1} parent=1 // pred_fallthru
      _
    %v111 = vld [vmem:[#allocation2] sm:$0xf]
    %v112 = vcvt.s32.f32 %v111
    %v113 = vld [vmem:[%s5] sm:$0xf]
    %vm114 = vcmask 31744
    %v116 = vsel %vm114, %v112, 0
    %vm118 = vcmask 1043456
    %v120 = vsel %vm118, %v113, 0
    %122 = vmatpush.msra.mxu0 0.0
    %123 = vmatpush.msra.mxu0 0.0
    %124 = vmatpush.msra.mxu0 0.0
    %125 = vmatpush.msra.mxu0 0.0
    %126 = vmatpush.msra.mxu0 0.0
    %127 = vmatpush.msra.mxu0 0.0
    %128 = vmatpush.msra.mxu0 0.0
    %129 = vmatpush.msra.mxu0 0.0
    %130 = vmatpush.msra.mxu0 0.0
    %131 = vmatpush.msra.mxu0 0.0
    %132 = vmatpush.msra.mxu0 0.0
    %133 = vmatpush.msra.mxu0 0.0
    %134 = vmatpush.msra.mxu0 0.0
    %135 = vmatpush.msra.mxu0 0.0
    %136 = vmatpush.msra.mxu0 0.0
    %137 = vmatpush.msra.mxu0 %v120
    %138 = vmatmul.f32.gmra.mxu0 %v116
    %v139 = vpop.f32.mrf.mxu0
    %v140 = vadd.f32 0.0, %v139
    %141 = vdwg.mxu0
    %v142 = vld [vmem:[#allocation5] sm:$0xf]
    %vm143 = vcmp.eq.f32.partialorder %v140, 0.0
    %v144 = vld [vmem:[#allocation7] sm:$0x1]
    %v145 = vperm.slane %v144, 0
    %v146 = vsel %vm143, %v145, 0.0
    %v147 = vadd.f32 %v142, %v146
    %vm148 = vcmp.eq.f32.partialorder %v140, 1.0
    %v149 = vld [vmem:[#allocation7 + $0x1] sm:$0x1]
    %v150 = vperm.slane %v149, 0
    %v151 = vsel %vm148, %v150, 0.0
    %v152 = vadd.f32 %v147, %v151
    %vm153 = vcmp.eq.f32.partialorder %v140, 2.0
    %v154 = vld [vmem:[#allocation7 + $0x2] sm:$0x1]
    %v155 = vperm.slane %v154, 0
    %v156 = vsel %vm153, %v155, 0.0
    %v157 = vadd.f32 %v152, %v156
    %vm158 = vcmp.eq.f32.partialorder %v140, 3.0
    %v159 = vld [vmem:[#allocation7 + $0x3] sm:$0x1]
    %v160 = vperm.slane %v159, 0
    %v161 = vsel %vm158, %v160, 0.0
    %v162 = vadd.f32 %v157, %v161
    %v163 = vld [vmem:[#allocation11] sm:$0xff]
    %v164 = vld [vmem:[#allocation11 + $0x8] sm:$0xff]
    %v165 = vld [vmem:[#allocation11 + $0x10] sm:$0xff]
    %v166 = vld [vmem:[#allocation11 + $0x18] sm:$0xff]
    %v167 = vld [vmem:[#allocation11 + $0x20] sm:$0xff]
    %v168 = vld [vmem:[#allocation11 + $0x28] sm:$0xff]
    %v169 = vld [vmem:[#allocation11 + $0x30] sm:$0xff]
    %v170 = vld [vmem:[#allocation11 + $0x38] sm:$0xff]
    %v171 = vld [vmem:[#allocation11 + $0x40] sm:$0xff]
    %v172 = vld [vmem:[#allocation11 + $0x48] sm:$0xff]
    %v173 = vld [vmem:[#allocation11 + $0x50] sm:$0xff]
    %v174 = vld [vmem:[#allocation11 + $0x58] sm:$0xff]
    %v175 = vld [vmem:[#allocation11 + $0x60] sm:$0xff]
    %v176 = vld [vmem:[#allocation11 + $0x68] sm:$0xff]
    %v177 = vld [vmem:[#allocation11 + $0x70] sm:$0xff]
    %v178 = vld [vmem:[#allocation11 + $0x78] sm:$0xff]
    %179 = vmatpush.msra.mxu0 %v178
    %180 = vmatpush.msra.mxu0 %v177
    %181 = vmatpush.msra.mxu0 %v176
    %182 = vmatpush.msra.mxu0 %v175
    %183 = vmatpush.msra.mxu0 %v174
    %184 = vmatpush.msra.mxu0 %v173
    %185 = vmatpush.msra.mxu0 %v172
    %186 = vmatpush.msra.mxu0 %v171
    %187 = vmatpush.msra.mxu0 %v170
    %188 = vmatpush.msra.mxu0 %v169
    %189 = vmatpush.msra.mxu0 %v168
    %190 = vmatpush.msra.mxu0 %v167
    %191 = vmatpush.msra.mxu0 %v166
    %192 = vmatpush.msra.mxu0 %v165
    %193 = vmatpush.msra.mxu0 %v164
    %194 = vmatpush.msra.mxu0 %v163
    %195 = vmatmul.f32.gmra.mxu0 %v162
    %v196 = vpop.f32.mrf.mxu0
    %v197 = vadd.f32 0.0, %v196
    %198 = vdwg.mxu0
    %v199 = vmul.f32 %v197, 0.03125
    %v200 = vsub.f32 %v162, %v199
    %v201 = vmul.f32 %v200, %v200
    %202 = vmatpush.msra.mxu0 %v178
    %203 = vmatpush.msra.mxu0 %v177
    %204 = vmatpush.msra.mxu0 %v176
    %205 = vmatpush.msra.mxu0 %v175
    %206 = vmatpush.msra.mxu0 %v174
    %207 = vmatpush.msra.mxu0 %v173
    %208 = vmatpush.msra.mxu0 %v172
    %209 = vmatpush.msra.mxu0 %v171
    %210 = vmatpush.msra.mxu0 %v170
    %211 = vmatpush.msra.mxu0 %v169
    %212 = vmatpush.msra.mxu0 %v168
    %213 = vmatpush.msra.mxu0 %v167
    %214 = vmatpush.msra.mxu0 %v166
    %215 = vmatpush.msra.mxu0 %v165
    %216 = vmatpush.msra.mxu0 %v164
    %217 = vmatpush.msra.mxu0 %v163
    %218 = vmatmul.f32.gmra.mxu0 %v201
    %v219 = vpop.f32.mrf.mxu0
    %v220 = vadd.f32 0.0, %v219
    %221 = vdwg.mxu0
    %v222 = vmul.f32 %v220, 0.03125
    %v223 = vadd.f32 %v222, 1e-05
    %v224 = vrsqrt.pop %v223
    %v225 = vmul.f32 %v224, %v223
    %v226 = vmul.f32 %v225, %v224
    %v227 = vmul.f32 0.5, %v226
    %v228 = vsub.f32 1.5, %v227
    %v229 = vmul.f32 %v224, %v228
    %vm230 = vweird.f32 %v223
    %vm231 = vweird.f32 %v224
    %vm232 = vmor %vm230, %vm231
    %v233 = vsel %vm232, %v224, %v229
    %v234 = vmul.f32 %v200, %v233
    %v235 = vld [vmem:[#allocation8] sm:$0x1]
    %v237 = vperm.slane %v235, 0
    %v239 = vmul.f32 %v234, %v237
    %v240 = vld [vmem:[#allocation10] sm:$0x1]
    %v242 = vperm.slane %v240, 0
    %v244 = vadd.f32 %v239, %v242
    %245 = vst [vmem:[#allocation13] sm:$0xf] %v244
    // Predicated region
    $region54: #{tpu_custom_call.1} parent=1 // pred_check
      _
    $region55: #{tpu_custom_call.1} parent=1 // pred_check_branch
      %247 = sbr.rel (0) target = $region57
    $region56: #{tpu_custom_call.1} parent=1 // pred_region
      %249 = vsyncadd [#allocation4], 0
      %s251 = sshll.u32 [#allocation13], 4
      %s252 = int_to_ptr.vmem [resolvable:$true] %s251
      %s253 = sshll.u32 %s7, 4
      %s254 = int_to_ptr.hbm [resolvable:$true] %s253
      %256 = dma.vmem_to_hbm [thread:$0]  %s252, 64, %s254, [#allocation4]
    $region57: #{tpu_custom_call.1} parent=1 // pred_fallthru
      _
    // Predicated region
    $region58: #{tpu_custom_call.1} parent=1 // pred_check
      _
    $region59: #{tpu_custom_call.1} parent=1 // pred_check_branch
      %258 = sbr.rel (0) target = $region61
    $region60: #{tpu_custom_call.1} parent=1 // pred_region
      %260 = dma.done [#allocation4], 64
    $region61: #{tpu_custom_call.1} parent=1 // pred_fallthru
      _
    %261 = vsyncpa [#allocation3], 1
    %262 = vsyncpa [#allocation6], 1
    %263 = vsyncpa [#allocation9], 1
    %264 = vsyncpa [#allocation12], 1
    %265 = vsyncpa [#allocation4], 1

</llo_original>
